<compile_context>
chip_gen: v5e
topology: v5e:2x2
jax: 0.10.0
libtpu: 0.0.40
codegen_flags: <defaults>
</compile_context>

<pallas_src>
import jax
import jax.numpy as jnp
from jax.experimental import pallas as pl
from jax.experimental.pallas import tpu as pltpu


def _round_up(n: int, m: int) -> int:
    return ((n + m - 1) // m) * m


def snake_kernel(x_ref, p_ref, o_ref):
    # Pure VPU streaming: one mul, cos, one sub, one mul, one add.
    x = x_ref[...].astype(jnp.float32)        # (tb, tf)
    two_a = p_ref[0:1, :]                     # (1, tf)  = 2*a          (f32)
    half_inv_a = p_ref[1:2, :]                # (1, tf)  = 1/(2*a) or 0 (f32)
    c = jnp.cos(x * two_a)
    o_ref[...] = (x + (1.0 - c) * half_inv_a).astype(o_ref.dtype)


def snake_pallas(x: jax.Array, a: jax.Array, *,
                 target_block_bytes: int = 4 * 1024 * 1024) -> jax.Array:
    """Apply Snake activation. x: (..., F), a: (F,)."""
    orig_shape = x.shape
    F = orig_shape[-1]
    assert a.shape == (F,), "a must have shape (F,) matching the last dim of x"

    x2 = x.reshape(-1, F)                     # view, no copy
    B = x2.shape[0]
    itemsize = x2.dtype.itemsize

    # Tile sizing by byte budget (~4 MiB per block regardless of dtype).
    tf = min(1024, _round_up(F, 128))
    tb = _round_up(max(8, target_block_bytes // (tf * itemsize)), 8)
    tb = min(tb, _round_up(B, 8))

    nf = pl.cdiv(F, tf)
    nb = pl.cdiv(B, tb)
    Fp = nf * tf

    # Fused parameter array: row 0 = 2a, row 1 = 1/(2a) (masked).  Subnormal
    # |a| is treated as the identity branch so 1/(2a) never overflows.
    a_f32 = a.astype(jnp.float32)
    safe = jnp.abs(a_f32) >= jnp.float32(jnp.finfo(jnp.float32).tiny)
    two_a = jnp.where(safe, 2.0 * a_f32, 0.0)
    half_inv = jnp.where(safe, 0.5 / jnp.where(safe, a_f32, 1.0), 0.0)
    params = jnp.stack([two_a, half_inv], axis=0)          # (2, F) f32
    if Fp != F:
        # Cheap pad of the tiny parameter array only; padded lanes are 0,
        # which is an exact pass-through (never reaches valid output anyway).
        params = jnp.pad(params, ((0, 0), (0, Fp - F)))

    if nf == 1:
        # Single feature block: 1-D batch grid so the sharded "parallel" axis
        # (v7x megacore) is the one with real work; the param tile is
        # resident by construction.
        grid = (nb,)
        x_spec = pl.BlockSpec((tb, tf), lambda i: (i, 0))
        p_spec = pl.BlockSpec((2, tf), lambda i: (0, 0))
        out_spec = pl.BlockSpec((tb, tf), lambda i: (i, 0))
        dims = ("parallel",)
    else:
        # Feature-outer, batch-inner: the (2, tf) parameter tile stays
        # resident across the long inner batch loop.
        grid = (nf, nb)
        x_spec = pl.BlockSpec((tb, tf), lambda j, i: (i, j))
        p_spec = pl.BlockSpec((2, tf), lambda j, i: (0, j))
        out_spec = pl.BlockSpec((tb, tf), lambda j, i: (i, j))
        dims = ("parallel", "parallel")

    out = pl.pallas_call(
        snake_kernel,
        out_shape=jax.ShapeDtypeStruct((B, F), x2.dtype),
        grid_spec=pltpu.PrefetchScalarGridSpec(
            num_scalar_prefetch=0,
            grid=grid,
            in_specs=[x_spec, p_spec],
            out_specs=out_spec,
        ),
        compiler_params=pltpu.CompilerParams(
            dimension_semantics=dims,
            # 4 MiB blocks, double-buffered in + out = 16 MiB; explicit limit
            # keeps sizing valid on v5e (16 MiB default) and v7x (64 MiB phys).
            vmem_limit_bytes=32 * 1024 * 1024,
        ),
    )(x2, params)

    return out.reshape(orig_shape)


def snake_ref(x, a):
    """Pure-JAX reference matching the PyTorch forward semantics."""
    return jnp.where(a == 0, x, x + jnp.square(jnp.sin(a * x)) / a)


if __name__ == "__main__":
    key = jax.random.PRNGKey(0)

    # Small shapes consistent with the module: Snake(in_features=256) applied
    # to a batch of 2 vectors of 256 features.
    B, F = 2, 256
    x = jax.random.normal(key, (B, F), dtype=jnp.float32)

    # Deterministic parameter init as in Snake.__init__ (a=1.0), with a few
    # zeroed entries to exercise the a == 0 identity branch.
    a = jnp.full((F,), 1.0, dtype=jnp.float32).at[:8].set(0.0)

    y = jax.block_until_ready(snake_pallas(x, a))
    y_ref = snake_ref(x, a)
    assert y.shape == x.shape and y.dtype == x.dtype
    assert jnp.allclose(y, y_ref, atol=1e-5, rtol=1e-5), "mismatch vs reference"

    # Leading-dims / ragged-block path (3-D input, B not a multiple of 8).
    x3 = jax.random.normal(jax.random.PRNGKey(1), (2, 3, F), dtype=jnp.float32)
    y3 = jax.block_until_ready(snake_pallas(x3, a))
    assert y3.shape == x3.shape
    assert jnp.allclose(y3, snake_ref(x3, a), atol=1e-5, rtol=1e-5), \
        "mismatch vs reference (3-D)"

    print("KERNEL_OK")
</pallas_src>

<mosaic_0001>
module attributes {stable_mosaic.version = 11 : i64} {
  func.func @snake_kernel(%arg0: i32, %arg1: memref<8x256xf32, #tpu.memory_space<vmem>>, %arg2: memref<2x256xf32, #tpu.memory_space<vmem>>, %arg3: memref<8x256xf32, #tpu.memory_space<vmem>>) attributes {dimension_semantics = [#tpu.dimension_semantics<parallel>], iteration_bounds = array<i64: 1>, scalar_prefetch = 0 : i64, scratch_operands = 0 : i64, tpu.core_type = #tpu.core_type<tc>, window_params = [{transform_indices = @transform_0, window_bounds = array<i64: 8, 256>}, {pipeline_mode = #tpu.pipeline_mode<synchronous>, transform_indices = @transform_1, window_bounds = array<i64: 2, 256>}, {transform_indices = @transform_2, window_bounds = array<i64: 8, 256>}]} {
    %c0 = arith.constant 0 : index
    %c0_0 = arith.constant 0 : index
    %0 = vector.load %arg1[%c0, %c0_0] : memref<8x256xf32, #tpu.memory_space<vmem>>, vector<8x256xf32>
    %c0_1 = arith.constant 0 : index
    %c0_2 = arith.constant 0 : index
    %1 = vector.load %arg2[%c0_1, %c0_2] : memref<2x256xf32, #tpu.memory_space<vmem>>, vector<1x256xf32>
    %c1 = arith.constant 1 : index
    %c0_3 = arith.constant 0 : index
    %2 = vector.load %arg2[%c1, %c0_3] : memref<2x256xf32, #tpu.memory_space<vmem>>, vector<1x256xf32>
    %3 = vector.broadcast %1 : vector<1x256xf32> to vector<8x256xf32>
    %4 = arith.mulf %0, %3 : vector<8x256xf32>
    %5 = math.cos %4 : vector<8x256xf32>
    %cst = arith.constant 1.000000e+00 : f32
    %6 = vector.broadcast %cst : f32 to vector<8x256xf32>
    %7 = arith.subf %6, %5 : vector<8x256xf32>
    %8 = vector.broadcast %2 : vector<1x256xf32> to vector<8x256xf32>
    %9 = arith.mulf %7, %8 : vector<8x256xf32>
    %10 = arith.addf %0, %9 : vector<8x256xf32>
    %c0_4 = arith.constant 0 : index
    %c0_5 = arith.constant 0 : index
    %11 = vector.load %arg3[%c0_4, %c0_5] : memref<8x256xf32, #tpu.memory_space<vmem>>, vector<8x256xf32>
    tpu.vector_store %arg3[%c0_4, %c0_5], %10 {strides = array<i32>} : memref<8x256xf32, #tpu.memory_space<vmem>>, vector<8x256xf32>,
    return
  }
  func.func @transform_0(%arg0: i32) -> (i32, i32) {
    %c0_i32 = arith.constant 0 : i32
    %c0_i32_0 = arith.constant 0 : i32
    return %arg0, %c0_i32 : i32, i32
  }
  func.func @transform_1(%arg0: i32) -> (i32, i32) {
    %c0_i32 = arith.constant 0 : i32
    %c0_i32_0 = arith.constant 0 : i32
    %c0_i32_1 = arith.constant 0 : i32
    return %c0_i32, %c0_i32_0 : i32, i32
  }
  func.func @transform_2(%arg0: i32) -> (i32, i32) {
    %c0_i32 = arith.constant 0 : i32
    %c0_i32_0 = arith.constant 0 : i32
    return %arg0, %c0_i32 : i32, i32
  }
}

</mosaic_0001>

<llo_original>
// kernel: tpu_custom_call.1
$region0: #{tpu_custom_call.1}
  #allocation0 [shape = 'u32[]', space=smem, size = 0x4, offset = 0x4, fixed_abs, tag = 'smem constant byte address 0x4 - core index']
  #allocation1 [shape = 'u32[72,128]{1,0:T(1,128)}', space=vmem, size = 0x9000, scoped, tag = 'internal scratch']
  %s0 = inlined_call_operand.hbm [shape: f32[2,256], index: 0, kind: input, shape index: {}]
  %s1 = inlined_call_operand.hbm [shape: f32[2,256], index: 1, kind: input, shape index: {}]
  %s2 = inlined_call_operand.hbm [shape: f32[2,256], index: 2, kind: output, shape index: {}]
  %s3 = sld [smem:[#allocation0]]
  $region26: #{tpu_custom_call.1} parent=0
    _
  %s5 = ssub.s32 1, %s3
  %s6 = scalar_select 0, %s5, %s3
  $region1: #{tpu_custom_call.1} parent=0
    #allocation2 [shape = 'u8[8192]{0}', space=vmem, size = 0x2000, scoped, tag = 'input window, operand 0, single buffered']
    #allocation3 [shape = 's32[1]{0}', space=sflag, size = 0x4, scoped, tag = 'scoped memory for tpu_custom_call.1']
    #allocation4 [shape = 's32[1]{0}', space=sflag, size = 0x4, scoped, tag = 'scoped memory for tpu_custom_call.1']
    #allocation5 [shape = 'u8[2048]{0}', space=vmem, size = 0x800, scoped, tag = 'input window, operand 1, single buffered']
    #allocation6 [shape = 's32[1]{0}', space=sflag, size = 0x4, scoped, tag = 'scoped memory for tpu_custom_call.1']
    #allocation7 [shape = 'u8[8192]{0}', space=vmem, size = 0x2000, scoped, tag = 'output window, operand 0, single buffered']
    %7 = vsyncpa [#allocation3], 0
    %8 = vsyncpa [#allocation6], 0
    %9 = vsyncpa [#allocation4], 0
    // Predicated region
    $region2: #{tpu_custom_call.1} parent=1 // pred_check
      _
    $region3: #{tpu_custom_call.1} parent=1 // pred_check_branch
      %11 = sbr.rel (0) target = $region5
    $region4: #{tpu_custom_call.1} parent=1 // pred_region
      %13 = vsyncadd [#allocation3], 192
      %s14 = sshll.u32 %s0, 4
      %s15 = int_to_ptr.hbm [resolvable:$true] %s14
      %s16 = sshll.u32 [#allocation2], 4
      %s17 = int_to_ptr.vmem [resolvable:$true] %s16
      %22 = dma.hbm_to_vmem [thread:$0]  %s15, 64, %s17, [#allocation3], 64, 64, 4
    $region5: #{tpu_custom_call.1} parent=1 // pred_fallthru
      _
    // Predicated region
    $region6: #{tpu_custom_call.1} parent=1 // pred_check
      _
    $region7: #{tpu_custom_call.1} parent=1 // pred_check_branch
      %24 = sbr.rel (0) target = $region9
    $region8: #{tpu_custom_call.1} parent=1 // pred_region
      %26 = vsyncadd [#allocation6], 0
      %s28 = sshll.u32 %s1, 4
      %s29 = int_to_ptr.hbm [resolvable:$true] %s28
      %s30 = sshll.u32 [#allocation5], 4
      %s31 = int_to_ptr.vmem [resolvable:$true] %s30
      %33 = dma.hbm_to_vmem [thread:$0]  %s29, 64, %s31, [#allocation6]
    $region9: #{tpu_custom_call.1} parent=1 // pred_fallthru
      _
    // Predicated region
    $region10: #{tpu_custom_call.1} parent=1 // pred_check
      _
    $region11: #{tpu_custom_call.1} parent=1 // pred_check_branch
      %35 = sbr.rel (0) target = $region13
    $region12: #{tpu_custom_call.1} parent=1 // pred_region
      %37 = dma.done [#allocation3], 256
    $region13: #{tpu_custom_call.1} parent=1 // pred_fallthru
      _
    // Predicated region
    $region14: #{tpu_custom_call.1} parent=1 // pred_check
      _
    $region15: #{tpu_custom_call.1} parent=1 // pred_check_branch
      %39 = sbr.rel (0) target = $region17
    $region16: #{tpu_custom_call.1} parent=1 // pred_region
      %41 = dma.done [#allocation6], 64
    $region17: #{tpu_custom_call.1} parent=1 // pred_fallthru
      _
    %v42 = vld [vmem:[#allocation2] sm:$0xf]
    %v43 = vld [vmem:[#allocation2 + $0x4] sm:$0xf]
    %v44 = vld [vmem:[#allocation2 + $0x8] sm:$0xf]
    %v45 = vld [vmem:[#allocation2 + $0xc] sm:$0xf]
    %v46 = vld [vmem:[#allocation5] ss:$2 sm:$0x3]
    %s47 = scalar_lea.vmem [#allocation5], 1
    %v48 = vld [vmem:[%s47] ss:$2 sm:$0x3]
    %v50 = vperm.slane %v46, 0
    %v51 = vperm.slane %v46, 1
    %v52 = vrot.slane %v51, 6
    %vm53 = vcmask 1041408
    %v54 = vsel %vm53, %v50, %v52
    %vm55 = vcmask 1043458
    %v56 = vsel %vm55, %v50, %v52
    %v57 = vrot.slane %v56, 2
    %vm58 = vcmask 1045508
    %v59 = vsel %vm58, %v50, %v52
    %v60 = vrot.slane %v59, 4
    %vm61 = vcmask 1045504
    %v62 = vsel %vm61, %v52, %v50
    %v63 = vrot.slane %v62, 6
    %v68 = vmul.f32 %v42, %v54
    %v69 = vmul.f32 %v43, %v57
    %v70 = vmul.f32 %v44, %v60
    %v71 = vmul.f32 %v45, %v63
    %v72 = vand.u32 2147483647, %v68
    %vm73 = vcmp.le.f32.partialorder %v72, 0.7853982
    %vm74 = vcmp.lt.s32.totalorder %v68, 0
    %v75 = vand.u32 %v68, 2139095040
    %v76 = vshrl.u32 %v75, 23
    %v77 = vsub.s32 %v76, 127
    %v78 = vand.u32 2147483647, %v68
    %v79 = vand.u32 %v78, 8388607
    %v80 = vor.u32 %v79, 8388608
    %v81 = vsub.s32 0, %v80
    %v82 = vadd.s32 %v77, 1
    %vm83 = vcmp.gt.s32.totalorder %v82, 0
    %v84 = vsel %vm83, %v82, 0
    %v85 = vshrl.u32 %v84, 5
    %v86 = vand.u32 %v84, 31
    %v87 = vsub.s32 32, %v86
    %v88 = vshrl.u32 683565275, %v87
    %v89 = vshll.u32 683565275, %v86
    %v90 = vshrl.u32 2475754826, %v87
    %v91 = vor.u32 %v89, %v90
    %v92 = vshll.u32 2475754826, %v86
    %v93 = vshrl.u32 2131351028, %v87
    %v94 = vor.u32 %v92, %v93
    %v95 = vshll.u32 2131351028, %v86
    %v96 = vshrl.u32 2102212464, %v87
    %v97 = vor.u32 %v95, %v96
    %v98 = vshll.u32 2102212464, %v86
    %v99 = vshrl.u32 920167782, %v87
    %v100 = vor.u32 %v98, %v99
    %v101 = vshll.u32 920167782, %v86
    %v102 = vshrl.u32 1326507024, %v87
    %v103 = vor.u32 %v101, %v102
    %vm104 = vcmp.lt.s32.totalorder %v85, 1
    %vm105 = vcmp.lt.s32.totalorder %v85, 2
    %vm106 = vcmp.lt.s32.totalorder %v85, 3
    %vm107 = vcmp.lt.s32.totalorder %v85, 4
    %v108 = vsel %vm104, %v88, %v91
    %v109 = vsel %vm107, %v97, 2102212464
    %v110 = vsel %vm106, %v94, %v109
    %v111 = vsel %vm105, %v108, %v110
    %v112 = vsel %vm104, %v91, %v94
    %v113 = vsel %vm107, %v100, 920167782
    %v114 = vsel %vm106, %v97, %v113
    %v115 = vsel %vm105, %v112, %v114
    %v116 = vsel %vm104, %v94, %v97
    %v117 = vsel %vm107, %v103, 1326507024
    %v118 = vsel %vm106, %v100, %v117
    %v119 = vsel %vm105, %v116, %v118
    %v120 = vshll.u32 %v80, 8
    %v121 = vand.u32 %v120, 65535
    %v122 = vshrl.u32 %v120, 16
    %v123 = vand.u32 %v119, 65535
    %v124 = vshrl.u32 %v119, 16
    %v125 = vmul.u32 %v121, %v123
    %v126 = vmul.u32 %v121, %v124
    %v127 = vmul.u32 %v122, %v123
    %v128 = vmul.u32 %v122, %v124
    %v129 = vshll.u32 %v126, 16
    %v130 = vshrl.u32 %v126, 16
    %v131 = vshll.u32 %v127, 16
    %v132 = vshrl.u32 %v127, 16
    %vm133 = vc.u32 %v125, %v129
    %v134 = vsel %vm133, 1, 0
    %v135 = vadd.s32 %v125, %v129
    %v136 = vadd.s32 %v128, %v134
    %vm137 = vc.u32 %v135, %v131
    %v138 = vsel %vm137, 1, 0
    %v139 = vadd.s32 %v135, %v131
    %v140 = vadd.s32 %v136, %v138
    %v141 = vadd.s32 %v140, %v130
    %v142 = vadd.s32 %v141, %v132
    %v143 = vand.u32 %v120, 65535
    %v144 = vshrl.u32 %v120, 16
    %v145 = vand.u32 %v115, 65535
    %v146 = vshrl.u32 %v115, 16
    %v147 = vmul.u32 %v143, %v145
    %v148 = vmul.u32 %v143, %v146
    %v149 = vmul.u32 %v144, %v145
    %v150 = vmul.u32 %v144, %v146
    %v151 = vshll.u32 %v148, 16
    %v152 = vshrl.u32 %v148, 16
    %v153 = vshll.u32 %v149, 16
    %v154 = vshrl.u32 %v149, 16
    %vm155 = vc.u32 %v147, %v151
    %v156 = vsel %vm155, 1, 0
    %v157 = vadd.s32 %v147, %v151
    %v158 = vadd.s32 %v150, %v156
    %vm159 = vc.u32 %v157, %v153
    %v160 = vsel %vm159, 1, 0
    %v161 = vadd.s32 %v157, %v153
    %v162 = vadd.s32 %v158, %v160
    %v163 = vadd.s32 %v162, %v152
    %v164 = vadd.s32 %v163, %v154
    %v165 = vmul.u32 %v120, %v111
    %v166 = vadd.s32 %v142, %v161
    %vm167 = vc.u32 %v142, %v161
    %v168 = vadd.s32 %v164, 1
    %v169 = vsel %vm167, %v168, %v164
    %v170 = vadd.s32 %v165, %v169
    %v171 = vadd.s32 %v170, 536870912
    %v172 = vshrl.u32 %v171, 30
    %v173 = vshll.u32 %v172, 30
    %v174 = vsub.s32 %v170, %v173
    %vm175 = vcmp.lt.s32.totalorder %v174, 0
    %v176 = vsub.s32 0, %v174
    %v177 = vsel %vm175, %v176, %v174
    %v178 = vclz %v177
    %v179 = vsub.s32 %v178, 2
    %vm180 = vcmp.gt.s32.totalorder 0, %v179
    %v181 = vsel %vm180, 0, %v179
    %v182 = vsub.s32 32, %v181
    %v183 = vshll.u32 %v174, %v181
    %v184 = vshrl.u32 %v166, %v182
    %v185 = vor.u32 %v183, %v184
    %v186 = vsub.s32 4294967266, %v181
    %v187 = vadd.s32 %v186, 127
    %v188 = vshll.u32 %v187, 23
    %v189 = vor.u32 4788187, %v188
    %v190 = vand.u32 2147483647, %v189
    %v192 = vcvt.s32.f32 %v185
    %v193 = vmul.f32 %v192, %v190
    %v194 = vxor.u32 %v193, 2147483648
    %v195 = vsel %vm74, %v194, %v193
    %v196 = vsub.s32 4, %v172
    %v197 = vsel %vm74, %v196, %v172
    %v198 = vsel %vm73, %v68, %v195
    %v199 = vsel %vm73, 0, %v197
    %v200 = vmul.f32 %v198, %v198
    %v201 = vmul.f32 %v200, -0.001358992
    %v202 = vadd.f32 %v201, 0.041655596
    %v203 = vmul.f32 %v200, %v202
    %v204 = vadd.f32 %v203, -0.4999988
    %v205 = vmul.f32 %v200, %v204
    %v206 = vadd.f32 1.0, %v205
    %v207 = vmul.f32 %v198, %v198
    %v208 = vmul.f32 %v207, -0.00019511016
    %v209 = vadd.f32 %v208, 0.008332121
    %v210 = vmul.f32 %v207, %v209
    %v211 = vadd.f32 %v210, -0.16666654
    %v212 = vmul.f32 %v207, %v211
    %v213 = vadd.f32 %v212, 1.0
    %v214 = vmul.f32 %v213, %v198
    %vm215 = vweird.f32 %v68
    %v216 = vand.u32 %v199, 3
    %vm217 = vcmp.lt.s32.totalorder %v216, 2
    %vm218 = vcmp.eq.s32.totalorder %v216, 0
    %v219 = vxor.u32 %v214, 2147483648
    %v220 = vsel %vm218, %v206, %v219
    %vm221 = vcmp.eq.s32.totalorder %v216, 2
    %v222 = vxor.u32 %v206, 2147483648
    %v223 = vsel %vm221, %v222, %v214
    %v224 = vsel %vm217, %v220, %v223
    %v225 = vsel %vm215, nan, %v224
    %v226 = vand.u32 2147483647, %v69
    %vm227 = vcmp.le.f32.partialorder %v226, 0.7853982
    %vm228 = vcmp.lt.s32.totalorder %v69, 0
    %v229 = vand.u32 %v69, 2139095040
    %v230 = vshrl.u32 %v229, 23
    %v231 = vsub.s32 %v230, 127
    %v232 = vand.u32 2147483647, %v69
    %v233 = vand.u32 %v232, 8388607
    %v234 = vor.u32 %v233, 8388608
    %v235 = vsub.s32 0, %v234
    %v236 = vadd.s32 %v231, 1
    %vm237 = vcmp.gt.s32.totalorder %v236, 0
    %v238 = vsel %vm237, %v236, 0
    %v239 = vshrl.u32 %v238, 5
    %v240 = vand.u32 %v238, 31
    %v241 = vsub.s32 32, %v240
    %v242 = vshrl.u32 683565275, %v241
    %v243 = vshll.u32 683565275, %v240
    %v244 = vshrl.u32 2475754826, %v241
    %v245 = vor.u32 %v243, %v244
    %v246 = vshll.u32 2475754826, %v240
    %v247 = vshrl.u32 2131351028, %v241
    %v248 = vor.u32 %v246, %v247
    %v249 = vshll.u32 2131351028, %v240
    %v250 = vshrl.u32 2102212464, %v241
    %v251 = vor.u32 %v249, %v250
    %v252 = vshll.u32 2102212464, %v240
    %v253 = vshrl.u32 920167782, %v241
    %v254 = vor.u32 %v252, %v253
    %v255 = vshll.u32 920167782, %v240
    %v256 = vshrl.u32 1326507024, %v241
    %v257 = vor.u32 %v255, %v256
    %vm258 = vcmp.lt.s32.totalorder %v239, 1
    %vm259 = vcmp.lt.s32.totalorder %v239, 2
    %vm260 = vcmp.lt.s32.totalorder %v239, 3
    %vm261 = vcmp.lt.s32.totalorder %v239, 4
    %v262 = vsel %vm258, %v242, %v245
    %v263 = vsel %vm261, %v251, 2102212464
    %v264 = vsel %vm260, %v248, %v263
    %v265 = vsel %vm259, %v262, %v264
    %v266 = vsel %vm258, %v245, %v248
    %v267 = vsel %vm261, %v254, 920167782
    %v268 = vsel %vm260, %v251, %v267
    %v269 = vsel %vm259, %v266, %v268
    %v270 = vsel %vm258, %v248, %v251
    %v271 = vsel %vm261, %v257, 1326507024
    %v272 = vsel %vm260, %v254, %v271
    %v273 = vsel %vm259, %v270, %v272
    %v274 = vshll.u32 %v234, 8
    %v275 = vand.u32 %v274, 65535
    %v276 = vshrl.u32 %v274, 16
    %v277 = vand.u32 %v273, 65535
    %v278 = vshrl.u32 %v273, 16
    %v279 = vmul.u32 %v275, %v277
    %v280 = vmul.u32 %v275, %v278
    %v281 = vmul.u32 %v276, %v277
    %v282 = vmul.u32 %v276, %v278
    %v283 = vshll.u32 %v280, 16
    %v284 = vshrl.u32 %v280, 16
    %v285 = vshll.u32 %v281, 16
    %v286 = vshrl.u32 %v281, 16
    %vm287 = vc.u32 %v279, %v283
    %v288 = vsel %vm287, 1, 0
    %v289 = vadd.s32 %v279, %v283
    %v290 = vadd.s32 %v282, %v288
    %vm291 = vc.u32 %v289, %v285
    %v292 = vsel %vm291, 1, 0
    %v293 = vadd.s32 %v289, %v285
    %v294 = vadd.s32 %v290, %v292
    %v295 = vadd.s32 %v294, %v284
    %v296 = vadd.s32 %v295, %v286
    %v297 = vand.u32 %v274, 65535
    %v298 = vshrl.u32 %v274, 16
    %v299 = vand.u32 %v269, 65535
    %v300 = vshrl.u32 %v269, 16
    %v301 = vmul.u32 %v297, %v299
    %v302 = vmul.u32 %v297, %v300
    %v303 = vmul.u32 %v298, %v299
    %v304 = vmul.u32 %v298, %v300
    %v305 = vshll.u32 %v302, 16
    %v306 = vshrl.u32 %v302, 16
    %v307 = vshll.u32 %v303, 16
    %v308 = vshrl.u32 %v303, 16
    %vm309 = vc.u32 %v301, %v305
    %v310 = vsel %vm309, 1, 0
    %v311 = vadd.s32 %v301, %v305
    %v312 = vadd.s32 %v304, %v310
    %vm313 = vc.u32 %v311, %v307
    %v314 = vsel %vm313, 1, 0
    %v315 = vadd.s32 %v311, %v307
    %v316 = vadd.s32 %v312, %v314
    %v317 = vadd.s32 %v316, %v306
    %v318 = vadd.s32 %v317, %v308
    %v319 = vmul.u32 %v274, %v265
    %v320 = vadd.s32 %v296, %v315
    %vm321 = vc.u32 %v296, %v315
    %v322 = vadd.s32 %v318, 1
    %v323 = vsel %vm321, %v322, %v318
    %v324 = vadd.s32 %v319, %v323
    %v325 = vadd.s32 %v324, 536870912
    %v326 = vshrl.u32 %v325, 30
    %v327 = vshll.u32 %v326, 30
    %v328 = vsub.s32 %v324, %v327
    %vm329 = vcmp.lt.s32.totalorder %v328, 0
    %v330 = vsub.s32 0, %v328
    %v331 = vsel %vm329, %v330, %v328
    %v332 = vclz %v331
    %v333 = vsub.s32 %v332, 2
    %vm334 = vcmp.gt.s32.totalorder 0, %v333
    %v335 = vsel %vm334, 0, %v333
    %v336 = vsub.s32 32, %v335
    %v337 = vshll.u32 %v328, %v335
    %v338 = vshrl.u32 %v320, %v336
    %v339 = vor.u32 %v337, %v338
    %v340 = vsub.s32 4294967266, %v335
    %v341 = vadd.s32 %v340, 127
    %v342 = vshll.u32 %v341, 23
    %v343 = vor.u32 4788187, %v342
    %v344 = vand.u32 2147483647, %v343
    %v346 = vcvt.s32.f32 %v339
    %v347 = vmul.f32 %v346, %v344
    %v348 = vxor.u32 %v347, 2147483648
    %v349 = vsel %vm228, %v348, %v347
    %v350 = vsub.s32 4, %v326
    %v351 = vsel %vm228, %v350, %v326
    %v352 = vsel %vm227, %v69, %v349
    %v353 = vsel %vm227, 0, %v351
    %v354 = vmul.f32 %v352, %v352
    %v355 = vmul.f32 %v354, -0.001358992
    %v356 = vadd.f32 %v355, 0.041655596
    %v357 = vmul.f32 %v354, %v356
    %v358 = vadd.f32 %v357, -0.4999988
    %v359 = vmul.f32 %v354, %v358
    %v360 = vadd.f32 1.0, %v359
    %v361 = vmul.f32 %v352, %v352
    %v362 = vmul.f32 %v361, -0.00019511016
    %v363 = vadd.f32 %v362, 0.008332121
    %v364 = vmul.f32 %v361, %v363
    %v365 = vadd.f32 %v364, -0.16666654
    %v366 = vmul.f32 %v361, %v365
    %v367 = vadd.f32 %v366, 1.0
    %v368 = vmul.f32 %v367, %v352
    %vm369 = vweird.f32 %v69
    %v370 = vand.u32 %v353, 3
    %vm371 = vcmp.lt.s32.totalorder %v370, 2
    %vm372 = vcmp.eq.s32.totalorder %v370, 0
    %v373 = vxor.u32 %v368, 2147483648
    %v374 = vsel %vm372, %v360, %v373
    %vm375 = vcmp.eq.s32.totalorder %v370, 2
    %v376 = vxor.u32 %v360, 2147483648
    %v377 = vsel %vm375, %v376, %v368
    %v378 = vsel %vm371, %v374, %v377
    %v379 = vsel %vm369, nan, %v378
    %v380 = vand.u32 2147483647, %v70
    %vm381 = vcmp.le.f32.partialorder %v380, 0.7853982
    %vm382 = vcmp.lt.s32.totalorder %v70, 0
    %v383 = vand.u32 %v70, 2139095040
    %v384 = vshrl.u32 %v383, 23
    %v385 = vsub.s32 %v384, 127
    %v386 = vand.u32 2147483647, %v70
    %v387 = vand.u32 %v386, 8388607
    %v388 = vor.u32 %v387, 8388608
    %v389 = vsub.s32 0, %v388
    %v390 = vadd.s32 %v385, 1
    %vm391 = vcmp.gt.s32.totalorder %v390, 0
    %v392 = vsel %vm391, %v390, 0
    %v393 = vshrl.u32 %v392, 5
    %v394 = vand.u32 %v392, 31
    %v395 = vsub.s32 32, %v394
    %v396 = vshrl.u32 683565275, %v395
    %v397 = vshll.u32 683565275, %v394
    %v398 = vshrl.u32 2475754826, %v395
    %v399 = vor.u32 %v397, %v398
    %v400 = vshll.u32 2475754826, %v394
    %v401 = vshrl.u32 2131351028, %v395
    %v402 = vor.u32 %v400, %v401
    %v403 = vshll.u32 2131351028, %v394
    %v404 = vshrl.u32 2102212464, %v395
    %v405 = vor.u32 %v403, %v404
    %v406 = vshll.u32 2102212464, %v394
    %v407 = vshrl.u32 920167782, %v395
    %v408 = vor.u32 %v406, %v407
    %v409 = vshll.u32 920167782, %v394
    %v410 = vshrl.u32 1326507024, %v395
    %v411 = vor.u32 %v409, %v410
    %vm412 = vcmp.lt.s32.totalorder %v393, 1
    %vm413 = vcmp.lt.s32.totalorder %v393, 2
    %vm414 = vcmp.lt.s32.totalorder %v393, 3
    %vm415 = vcmp.lt.s32.totalorder %v393, 4
    %v416 = vsel %vm412, %v396, %v399
    %v417 = vsel %vm415, %v405, 2102212464
    %v418 = vsel %vm414, %v402, %v417
    %v419 = vsel %vm413, %v416, %v418
    %v420 = vsel %vm412, %v399, %v402
    %v421 = vsel %vm415, %v408, 920167782
    %v422 = vsel %vm414, %v405, %v421
    %v423 = vsel %vm413, %v420, %v422
    %v424 = vsel %vm412, %v402, %v405
    %v425 = vsel %vm415, %v411, 1326507024
    %v426 = vsel %vm414, %v408, %v425
    %v427 = vsel %vm413, %v424, %v426
    %v428 = vshll.u32 %v388, 8
    %v429 = vand.u32 %v428, 65535
    %v430 = vshrl.u32 %v428, 16
    %v431 = vand.u32 %v427, 65535
    %v432 = vshrl.u32 %v427, 16
    %v433 = vmul.u32 %v429, %v431
    %v434 = vmul.u32 %v429, %v432
    %v435 = vmul.u32 %v430, %v431
    %v436 = vmul.u32 %v430, %v432
    %v437 = vshll.u32 %v434, 16
    %v438 = vshrl.u32 %v434, 16
    %v439 = vshll.u32 %v435, 16
    %v440 = vshrl.u32 %v435, 16
    %vm441 = vc.u32 %v433, %v437
    %v442 = vsel %vm441, 1, 0
    %v443 = vadd.s32 %v433, %v437
    %v444 = vadd.s32 %v436, %v442
    %vm445 = vc.u32 %v443, %v439
    %v446 = vsel %vm445, 1, 0
    %v447 = vadd.s32 %v443, %v439
    %v448 = vadd.s32 %v444, %v446
    %v449 = vadd.s32 %v448, %v438
    %v450 = vadd.s32 %v449, %v440
    %v451 = vand.u32 %v428, 65535
    %v452 = vshrl.u32 %v428, 16
    %v453 = vand.u32 %v423, 65535
    %v454 = vshrl.u32 %v423, 16
    %v455 = vmul.u32 %v451, %v453
    %v456 = vmul.u32 %v451, %v454
    %v457 = vmul.u32 %v452, %v453
    %v458 = vmul.u32 %v452, %v454
    %v459 = vshll.u32 %v456, 16
    %v460 = vshrl.u32 %v456, 16
    %v461 = vshll.u32 %v457, 16
    %v462 = vshrl.u32 %v457, 16
    %vm463 = vc.u32 %v455, %v459
    %v464 = vsel %vm463, 1, 0
    %v465 = vadd.s32 %v455, %v459
    %v466 = vadd.s32 %v458, %v464
    %vm467 = vc.u32 %v465, %v461
    %v468 = vsel %vm467, 1, 0
    %v469 = vadd.s32 %v465, %v461
    %v470 = vadd.s32 %v466, %v468
    %v471 = vadd.s32 %v470, %v460
    %v472 = vadd.s32 %v471, %v462
    %v473 = vmul.u32 %v428, %v419
    %v474 = vadd.s32 %v450, %v469
    %vm475 = vc.u32 %v450, %v469
    %v476 = vadd.s32 %v472, 1
    %v477 = vsel %vm475, %v476, %v472
    %v478 = vadd.s32 %v473, %v477
    %v479 = vadd.s32 %v478, 536870912
    %v480 = vshrl.u32 %v479, 30
    %v481 = vshll.u32 %v480, 30
    %v482 = vsub.s32 %v478, %v481
    %vm483 = vcmp.lt.s32.totalorder %v482, 0
    %v484 = vsub.s32 0, %v482
    %v485 = vsel %vm483, %v484, %v482
    %v486 = vclz %v485
    %v487 = vsub.s32 %v486, 2
    %vm488 = vcmp.gt.s32.totalorder 0, %v487
    %v489 = vsel %vm488, 0, %v487
    %v490 = vsub.s32 32, %v489
    %v491 = vshll.u32 %v482, %v489
    %v492 = vshrl.u32 %v474, %v490
    %v493 = vor.u32 %v491, %v492
    %v494 = vsub.s32 4294967266, %v489
    %v495 = vadd.s32 %v494, 127
    %v496 = vshll.u32 %v495, 23
    %v497 = vor.u32 4788187, %v496
    %v498 = vand.u32 2147483647, %v497
    %v500 = vcvt.s32.f32 %v493
    %v501 = vmul.f32 %v500, %v498
    %v502 = vxor.u32 %v501, 2147483648
    %v503 = vsel %vm382, %v502, %v501
    %v504 = vsub.s32 4, %v480
    %v505 = vsel %vm382, %v504, %v480
    %v506 = vsel %vm381, %v70, %v503
    %v507 = vsel %vm381, 0, %v505
    %v508 = vmul.f32 %v506, %v506
    %v509 = vmul.f32 %v508, -0.001358992
    %v510 = vadd.f32 %v509, 0.041655596
    %v511 = vmul.f32 %v508, %v510
    %v512 = vadd.f32 %v511, -0.4999988
    %v513 = vmul.f32 %v508, %v512
    %v514 = vadd.f32 1.0, %v513
    %v515 = vmul.f32 %v506, %v506
    %v516 = vmul.f32 %v515, -0.00019511016
    %v517 = vadd.f32 %v516, 0.008332121
    %v518 = vmul.f32 %v515, %v517
    %v519 = vadd.f32 %v518, -0.16666654
    %v520 = vmul.f32 %v515, %v519
    %v521 = vadd.f32 %v520, 1.0
    %v522 = vmul.f32 %v521, %v506
    %vm523 = vweird.f32 %v70
    %v524 = vand.u32 %v507, 3
    %vm525 = vcmp.lt.s32.totalorder %v524, 2
    %vm526 = vcmp.eq.s32.totalorder %v524, 0
    %v527 = vxor.u32 %v522, 2147483648
    %v528 = vsel %vm526, %v514, %v527
    %vm529 = vcmp.eq.s32.totalorder %v524, 2
    %v530 = vxor.u32 %v514, 2147483648
    %v531 = vsel %vm529, %v530, %v522
    %v532 = vsel %vm525, %v528, %v531
    %v533 = vsel %vm523, nan, %v532
    %v534 = vand.u32 2147483647, %v71
    %vm535 = vcmp.le.f32.partialorder %v534, 0.7853982
    %vm536 = vcmp.lt.s32.totalorder %v71, 0
    %v537 = vand.u32 %v71, 2139095040
    %v538 = vshrl.u32 %v537, 23
    %v539 = vsub.s32 %v538, 127
    %v540 = vand.u32 2147483647, %v71
    %v541 = vand.u32 %v540, 8388607
    %v542 = vor.u32 %v541, 8388608
    %v543 = vsub.s32 0, %v542
    %v544 = vadd.s32 %v539, 1
    %vm545 = vcmp.gt.s32.totalorder %v544, 0
    %v546 = vsel %vm545, %v544, 0
    %v547 = vshrl.u32 %v546, 5
    %v548 = vand.u32 %v546, 31
    %v549 = vsub.s32 32, %v548
    %v550 = vshrl.u32 683565275, %v549
    %v551 = vshll.u32 683565275, %v548
    %v552 = vshrl.u32 2475754826, %v549
    %v553 = vor.u32 %v551, %v552
    %v554 = vshll.u32 2475754826, %v548
    %v555 = vshrl.u32 2131351028, %v549
    %v556 = vor.u32 %v554, %v555
    %v557 = vshll.u32 2131351028, %v548
    %v558 = vshrl.u32 2102212464, %v549
    %v559 = vor.u32 %v557, %v558
    %v560 = vshll.u32 2102212464, %v548
    %v561 = vshrl.u32 920167782, %v549
    %v562 = vor.u32 %v560, %v561
    %v563 = vshll.u32 920167782, %v548
    %v564 = vshrl.u32 1326507024, %v549
    %v565 = vor.u32 %v563, %v564
    %vm566 = vcmp.lt.s32.totalorder %v547, 1
    %vm567 = vcmp.lt.s32.totalorder %v547, 2
    %vm568 = vcmp.lt.s32.totalorder %v547, 3
    %vm569 = vcmp.lt.s32.totalorder %v547, 4
    %v570 = vsel %vm566, %v550, %v553
    %v571 = vsel %vm569, %v559, 2102212464
    %v572 = vsel %vm568, %v556, %v571
    %v573 = vsel %vm567, %v570, %v572
    %v574 = vsel %vm566, %v553, %v556
    %v575 = vsel %vm569, %v562, 920167782
    %v576 = vsel %vm568, %v559, %v575
    %v577 = vsel %vm567, %v574, %v576
    %v578 = vsel %vm566, %v556, %v559
    %v579 = vsel %vm569, %v565, 1326507024
    %v580 = vsel %vm568, %v562, %v579
    %v581 = vsel %vm567, %v578, %v580
    %v582 = vshll.u32 %v542, 8
    %v583 = vand.u32 %v582, 65535
    %v584 = vshrl.u32 %v582, 16
    %v585 = vand.u32 %v581, 65535
    %v586 = vshrl.u32 %v581, 16
    %v587 = vmul.u32 %v583, %v585
    %v588 = vmul.u32 %v583, %v586
    %v589 = vmul.u32 %v584, %v585
    %v590 = vmul.u32 %v584, %v586
    %v591 = vshll.u32 %v588, 16
    %v592 = vshrl.u32 %v588, 16
    %v593 = vshll.u32 %v589, 16
    %v594 = vshrl.u32 %v589, 16
    %vm595 = vc.u32 %v587, %v591
    %v596 = vsel %vm595, 1, 0
    %v597 = vadd.s32 %v587, %v591
    %v598 = vadd.s32 %v590, %v596
    %vm599 = vc.u32 %v597, %v593
    %v600 = vsel %vm599, 1, 0
    %v601 = vadd.s32 %v597, %v593
    %v602 = vadd.s32 %v598, %v600
    %v603 = vadd.s32 %v602, %v592
    %v604 = vadd.s32 %v603, %v594
    %v605 = vand.u32 %v582, 65535
    %v606 = vshrl.u32 %v582, 16
    %v607 = vand.u32 %v577, 65535
    %v608 = vshrl.u32 %v577, 16
    %v609 = vmul.u32 %v605, %v607
    %v610 = vmul.u32 %v605, %v608
    %v611 = vmul.u32 %v606, %v607
    %v612 = vmul.u32 %v606, %v608
    %v613 = vshll.u32 %v610, 16
    %v614 = vshrl.u32 %v610, 16
    %v615 = vshll.u32 %v611, 16
    %v616 = vshrl.u32 %v611, 16
    %vm617 = vc.u32 %v609, %v613
    %v618 = vsel %vm617, 1, 0
    %v619 = vadd.s32 %v609, %v613
    %v620 = vadd.s32 %v612, %v618
    %vm621 = vc.u32 %v619, %v615
    %v622 = vsel %vm621, 1, 0
    %v623 = vadd.s32 %v619, %v615
    %v624 = vadd.s32 %v620, %v622
    %v625 = vadd.s32 %v624, %v614
    %v626 = vadd.s32 %v625, %v616
    %v627 = vmul.u32 %v582, %v573
    %v628 = vadd.s32 %v604, %v623
    %vm629 = vc.u32 %v604, %v623
    %v630 = vadd.s32 %v626, 1
    %v631 = vsel %vm629, %v630, %v626
    %v632 = vadd.s32 %v627, %v631
    %v633 = vadd.s32 %v632, 536870912
    %v634 = vshrl.u32 %v633, 30
    %v635 = vshll.u32 %v634, 30
    %v636 = vsub.s32 %v632, %v635
    %vm637 = vcmp.lt.s32.totalorder %v636, 0
    %v638 = vsub.s32 0, %v636
    %v639 = vsel %vm637, %v638, %v636
    %v640 = vclz %v639
    %v641 = vsub.s32 %v640, 2
    %vm642 = vcmp.gt.s32.totalorder 0, %v641
    %v643 = vsel %vm642, 0, %v641
    %v644 = vsub.s32 32, %v643
    %v645 = vshll.u32 %v636, %v643
    %v646 = vshrl.u32 %v628, %v644
    %v647 = vor.u32 %v645, %v646
    %v648 = vsub.s32 4294967266, %v643
    %v649 = vadd.s32 %v648, 127
    %v650 = vshll.u32 %v649, 23
    %v651 = vor.u32 4788187, %v650
    %v652 = vand.u32 2147483647, %v651
    %v654 = vcvt.s32.f32 %v647
    %v655 = vmul.f32 %v654, %v652
    %v656 = vxor.u32 %v655, 2147483648
    %v657 = vsel %vm536, %v656, %v655
    %v658 = vsub.s32 4, %v634
    %v659 = vsel %vm536, %v658, %v634
    %v660 = vsel %vm535, %v71, %v657
    %v661 = vsel %vm535, 0, %v659
    %v662 = vmul.f32 %v660, %v660
    %v663 = vmul.f32 %v662, -0.001358992
    %v664 = vadd.f32 %v663, 0.041655596
    %v665 = vmul.f32 %v662, %v664
    %v666 = vadd.f32 %v665, -0.4999988
    %v667 = vmul.f32 %v662, %v666
    %v668 = vadd.f32 1.0, %v667
    %v669 = vmul.f32 %v660, %v660
    %v670 = vmul.f32 %v669, -0.00019511016
    %v671 = vadd.f32 %v670, 0.008332121
    %v672 = vmul.f32 %v669, %v671
    %v673 = vadd.f32 %v672, -0.16666654
    %v674 = vmul.f32 %v669, %v673
    %v675 = vadd.f32 %v674, 1.0
    %v676 = vmul.f32 %v675, %v660
    %vm677 = vweird.f32 %v71
    %v678 = vand.u32 %v661, 3
    %vm679 = vcmp.lt.s32.totalorder %v678, 2
    %vm680 = vcmp.eq.s32.totalorder %v678, 0
    %v681 = vxor.u32 %v676, 2147483648
    %v682 = vsel %vm680, %v668, %v681
    %vm683 = vcmp.eq.s32.totalorder %v678, 2
    %v684 = vxor.u32 %v668, 2147483648
    %v685 = vsel %vm683, %v684, %v676
    %v686 = vsel %vm679, %v682, %v685
    %v687 = vsel %vm677, nan, %v686
    %v688 = vsub.f32 1.0, %v225
    %v689 = vsub.f32 1.0, %v379
    %v690 = vsub.f32 1.0, %v533
    %v691 = vsub.f32 1.0, %v687
    %v693 = vperm.slane %v48, 0
    %v694 = vperm.slane %v48, 1
    %v695 = vrot.slane %v694, 6
    %v696 = vsel %vm53, %v693, %v695
    %v697 = vsel %vm55, %v693, %v695
    %v698 = vrot.slane %v697, 2
    %v699 = vsel %vm58, %v693, %v695
    %v700 = vrot.slane %v699, 4
    %v701 = vsel %vm61, %v695, %v693
    %v702 = vrot.slane %v701, 6
    %v707 = vmul.f32 %v688, %v696
    %v708 = vmul.f32 %v689, %v698
    %v709 = vmul.f32 %v690, %v700
    %v710 = vmul.f32 %v691, %v702
    %v711 = vadd.f32 %v42, %v707
    %v712 = vadd.f32 %v43, %v708
    %v713 = vadd.f32 %v44, %v709
    %v714 = vadd.f32 %v45, %v710
    %715 = vst [vmem:[#allocation7] sm:$0xf] %v711
    %716 = vst [vmem:[#allocation7 + $0x4] sm:$0xf] %v712
    %717 = vst [vmem:[#allocation7 + $0x8] sm:$0xf] %v713
    %718 = vst [vmem:[#allocation7 + $0xc] sm:$0xf] %v714
    // Predicated region
    $region18: #{tpu_custom_call.1} parent=1 // pred_check
      _
    $region19: #{tpu_custom_call.1} parent=1 // pred_check_branch
      %720 = sbr.rel (0) target = $region21
    $region20: #{tpu_custom_call.1} parent=1 // pred_region
      %722 = vsyncadd [#allocation4], 192
      %s723 = sshll.u32 [#allocation7], 4
      %s724 = int_to_ptr.vmem [resolvable:$true] %s723
      %s725 = sshll.u32 %s2, 4
      %s726 = int_to_ptr.hbm [resolvable:$true] %s725
      %731 = dma.vmem_to_hbm [thread:$0]  %s724, 64, %s726, [#allocation4], 64, 64, 4
    $region21: #{tpu_custom_call.1} parent=1 // pred_fallthru
      _
    // Predicated region
    $region22: #{tpu_custom_call.1} parent=1 // pred_check
      _
    $region23: #{tpu_custom_call.1} parent=1 // pred_check_branch
      %733 = sbr.rel (0) target = $region25
    $region24: #{tpu_custom_call.1} parent=1 // pred_region
      %735 = dma.done [#allocation4], 256
    $region25: #{tpu_custom_call.1} parent=1 // pred_fallthru
      _
    %736 = vsyncpa [#allocation3], 1
    %737 = vsyncpa [#allocation6], 1
    %738 = vsyncpa [#allocation4], 1

</llo_original>
